<compile_context>
chip_gen: v5e
topology: v5e:2x2
jax: 0.10.0
libtpu: 0.0.40
codegen_flags: <defaults>
</compile_context>

<pallas_src>
import jax
import jax.numpy as jnp
from jax.experimental import pallas as pl
from jax.experimental.pallas import tpu as pltpu

N_PRED = 4      # n_pred_chans
N_STATIC = 2    # n_static_channels
N_DYNAMIC = 2   # n_dynamic_channels
INP_CHANS = N_PRED * 2 + N_STATIC + N_DYNAMIC   # 12
OUT_CHANS = N_PRED                              # 4
T_HIDDEN = 32                                   # hidden size of time-embedding MLP


def _make_kernel(group_chans, c_out):
    """Fused channel-concat + 1x1-conv + FiLM kernel for fixed group sizes."""
    n_groups = len(group_chans)

    def kernel(weff_ref, seff_ref, *refs):
        # weff_ref: (B, C_in*C_out) f32 in SMEM  (FiLM-folded 1x1-conv weights)
        # seff_ref: (B, C_out)      f32 in SMEM  (FiLM-folded bias + shift)
        # refs[:n_groups]: per-group VMEM blocks, each (1, c_g, TR, C)
        # refs[n_groups] : output VMEM block (1, C_out, TR, C)
        x_refs = refs[:n_groups]
        o_ref = refs[n_groups]
        b = pl.program_id(0)

        # Input-channel-outer accumulation: each input slab is loaded from
        # VMEM and cast to f32 exactly once, then feeds all output channels.
        # All compute slabs are 2-D (TR, C) sublane/lane-dense tiles, so the
        # unrolled scalar-broadcast FMAs stay hidden under the HBM pipeline.
        accs = [None] * c_out
        ci = 0
        for gref, c_g in zip(x_refs, group_chans):
            for k in range(c_g):
                xc = gref[0, k].astype(jnp.float32)          # (TR, C) slab
                for co in range(c_out):
                    term = xc * weff_ref[b, ci * c_out + co]
                    accs[co] = term if accs[co] is None else accs[co] + term
                ci += 1

        for co in range(c_out):
            o_ref[0, co] = (accs[co] + seff_ref[b, co]).astype(o_ref.dtype)

    return kernel


def _vmem_budget_and_limit():
    """Chip-aware VMEM tiling budget plus an explicit scoped-VMEM limit."""
    try:
        cap = int(pltpu.get_tpu_info().vmem_capacity_bytes)
    except Exception:
        cap = 64 << 20                       # conservative: v7x per-TC VMEM
    budget = min(cap // 4, 24 << 20)         # v5e/v6e: 24 MiB, v7x: 16 MiB
    limit = min(cap // 2, budget + (8 << 20))
    return budget, limit


def _pick_tile_rows(B, R, C, c_in, c_out, in_itemsize, out_itemsize, budget):
    """Largest row tile fitting a double-buffered VMEM budget (dtype-aware)."""
    # double-buffered bytes per row per grid step: all input streams + output
    per_row = 2 * C * (c_in * in_itemsize + c_out * out_itemsize)
    tr = budget // max(per_row, 1)
    if tr >= R:
        tr = R                               # full dim -> always layout-legal
    else:
        tr = max(8, (tr // 8) * 8)           # multiple of 8 sublanes
    # Megacore balance: v7x shards "parallel" grid axes across 2 TensorCores;
    # aim for >= 4 total grid steps so neither core sits idle.
    while B * pl.cdiv(R, tr) < 4 and tr >= 16:
        tr = max(8, (tr // 2 // 8) * 8)
    return tr


def time_aware_model_pallas(groups, w_eff, shift_eff):
    """Fused channel-concat + 1x1 conv + FiLM on NCHW inputs.

    groups:    list of NCHW arrays (B, c_g, H, W); channel order matches w_eff rows.
    w_eff:     (B, C_in, C_out) FiLM-folded weights.
    shift_eff: (B, C_out) FiLM-folded shift.
    """
    B, _, H, W = groups[0].shape
    group_chans = tuple(int(g.shape[1]) for g in groups)
    c_in = sum(group_chans)
    c_out = int(w_eff.shape[-1])
    out_dtype = jnp.result_type(*(g.dtype for g in groups))

    # Lane-dense spatial layout: flatten H*W and fold it into (rows, 128) when
    # possible (free reshape of contiguous arrays). Fallback keeps (H, W).
    HW = H * W
    if HW % 128 == 0:
        R, C = HW // 128, 128
    else:
        # TODO(synk): H*W not a multiple of 128 keeps the lane-padded NCHW
        # layout; padding would cost a full extra HBM round trip of the input.
        R, C = H, W
    groups = [g.reshape(B, c_g, R, C) for g, c_g in zip(groups, group_chans)]

    in_itemsize = max(jnp.dtype(g.dtype).itemsize for g in groups)
    out_itemsize = jnp.dtype(out_dtype).itemsize
    budget, vmem_limit = _vmem_budget_and_limit()
    tr = _pick_tile_rows(B, R, C, c_in, c_out, in_itemsize, out_itemsize, budget)
    grid = (B, pl.cdiv(R, tr))

    # NOTE: partial tail row-blocks compute on Pallas-padded rows; this is
    # correct because the op is purely per-element and the writeback of the
    # tail block is masked — do not introduce cross-row ops without revisiting.
    smem_spec = pl.BlockSpec(memory_space=pltpu.MemorySpace.SMEM)
    in_specs = [smem_spec, smem_spec]
    for c_g in group_chans:
        in_specs.append(
            pl.BlockSpec((1, c_g, tr, C), lambda bi, ri: (bi, 0, ri, 0)))
    out_spec = pl.BlockSpec((1, c_out, tr, C), lambda bi, ri: (bi, 0, ri, 0))

    kernel = _make_kernel(group_chans, c_out)

    out = pl.pallas_call(
        kernel,
        out_shape=jax.ShapeDtypeStruct((B, c_out, R, C), out_dtype),
        grid_spec=pltpu.PrefetchScalarGridSpec(
            num_scalar_prefetch=0,
            grid=grid,
            in_specs=in_specs,
            out_specs=out_spec),
        compiler_params=pltpu.CompilerParams(
            dimension_semantics=("parallel", "parallel"),
            vmem_limit_bytes=vmem_limit),
    )(w_eff.reshape(B, c_in * c_out).astype(jnp.float32),
      shift_eff.astype(jnp.float32),
      *groups)
    return out.reshape(B, c_out, H, W)


class TimeAwareInterpolationWrapperPallas:
    """JAX/Pallas port of TimeAwareInterpolationWrapper with a synthetic inner model."""

    def __init__(self, key, n_pred_chans, n_static_channels, n_dynamic_channels):
        inp_chans = n_pred_chans * 2 + n_static_channels + n_dynamic_channels
        k1, k2, k3, k4, k5, k6 = jax.random.split(key, 6)
        # 1x1 conv (channel mixing)
        self.w = (jax.random.normal(k1, (inp_chans, n_pred_chans), jnp.float32)
                  / jnp.sqrt(float(inp_chans)))
        self.b = 0.01 * jax.random.normal(k2, (n_pred_chans,), jnp.float32)
        # time-embedding MLP: s (B,1) -> hidden -> 2*C_out FiLM params
        self.wt1 = jax.random.normal(k3, (1, T_HIDDEN), jnp.float32)
        self.bt1 = 0.01 * jax.random.normal(k4, (T_HIDDEN,), jnp.float32)
        self.wt2 = (jax.random.normal(k5, (T_HIDDEN, 2 * n_pred_chans), jnp.float32)
                    / jnp.sqrt(float(T_HIDDEN)))
        self.bt2 = 0.01 * jax.random.normal(k6, (2 * n_pred_chans,), jnp.float32)
        self.inp_chans = inp_chans
        self.n_pred_chans = n_pred_chans

    def _film(self, s):
        s_col = s[:, None]                              # s.unsqueeze(1) -> (B, 1)
        h = jax.nn.silu(s_col @ self.wt1 + self.bt1)    # tiny time MLP (host-side glue)
        film = h @ self.wt2 + self.bt2                  # (B, 2*C_out)
        scale, shift = jnp.split(film, 2, axis=-1)
        return scale, shift

    def __call__(self, x0, x, xu, static, s):
        # Exactly mirrors the PyTorch wrapper: conditional channel list (dim=-3),
        # but the concat itself is fused into the Pallas kernel inputs.
        inputlist = [x0, x]
        if xu is not None:
            inputlist.append(xu)
        if static is not None:
            inputlist.append(static)
        total_chans = sum(a.shape[-3] for a in inputlist)
        # Same constraint PyTorch enforces implicitly: the inner model was built
        # with the full inp_chans, so None inputs must correspond to 0 channels.
        assert total_chans == self.inp_chans, (total_chans, self.inp_chans)

        scale, shift = self._film(s)                    # (B, C_out) each
        gain = 1.0 + scale
        # Fold FiLM + conv bias into per-batch effective weights / shift:
        #   y = (x @ w + b) * (1+scale) + shift = x @ (w*gain) + (b*gain + shift)
        w_eff = self.w[None, :, :] * gain[:, None, :]   # (B, C_in, C_out)
        shift_eff = shift + self.b[None, :] * gain      # (B, C_out)

        return time_aware_model_pallas(inputlist, w_eff, shift_eff)


def _reference(wrapper, x0, x, xu, static, s):
    """Pure-JAX reference for correctness checking."""
    x_in = jnp.concatenate([x0, x, xu, static], axis=-3)
    scale, shift = wrapper._film(s)
    B, C_in, H, W = x_in.shape
    x_flat = jnp.transpose(x_in, (0, 2, 3, 1)).reshape(B, H * W, C_in)
    y = x_flat @ wrapper.w + wrapper.b
    y = y * (1.0 + scale[:, None, :]) + shift[:, None, :]
    return jnp.transpose(y.reshape(B, H, W, -1), (0, 3, 1, 2))


if __name__ == "__main__":
    key = jax.random.PRNGKey(0)
    kp, k0, k1, k2, k3, k4 = jax.random.split(key, 6)

    B, H, W = 2, 16, 16
    x0 = jax.random.normal(k0, (B, N_PRED, H, W), jnp.float32)
    x = jax.random.normal(k1, (B, N_PRED, H, W), jnp.float32)
    xu = jax.random.normal(k2, (B, N_DYNAMIC, H, W), jnp.float32)
    static = jax.random.normal(k3, (B, N_STATIC, H, W), jnp.float32)
    s = jax.random.uniform(k4, (B,), jnp.float32)

    wrapper = TimeAwareInterpolationWrapperPallas(kp, N_PRED, N_STATIC, N_DYNAMIC)

    out = wrapper(x0, x, xu, static, s)
    out = jax.block_until_ready(out)
    assert out.shape == (B, N_PRED, H, W), out.shape

    ref = jax.block_until_ready(_reference(wrapper, x0, x, xu, static, s))
    assert jnp.allclose(out, ref, atol=1e-4, rtol=1e-4), "mismatch vs reference"

    print("KERNEL_OK")
</pallas_src>

<mosaic_0001>
module attributes {stable_mosaic.version = 11 : i64} {
  func.func @kernel(%arg0: i32, %arg1: i32, %arg2: memref<2x48xf32, #tpu.memory_space<smem>>, %arg3: memref<2x4xf32, #tpu.memory_space<smem>>, %arg4: memref<1x4x2x128xf32, #tpu.memory_space<vmem>>, %arg5: memref<1x4x2x128xf32, #tpu.memory_space<vmem>>, %arg6: memref<1x2x2x128xf32, #tpu.memory_space<vmem>>, %arg7: memref<1x2x2x128xf32, #tpu.memory_space<vmem>>, %arg8: memref<1x4x2x128xf32, #tpu.memory_space<vmem>>) attributes {dimension_semantics = [#tpu.dimension_semantics<parallel>, #tpu.dimension_semantics<parallel>], iteration_bounds = array<i64: 2, 1>, scalar_prefetch = 0 : i64, scratch_operands = 0 : i64, tpu.core_type = #tpu.core_type<tc>, window_params = [{transform_indices = @transform_0, window_bounds = array<i64: 2, 48>}, {transform_indices = @transform_1, window_bounds = array<i64: 2, 4>}, {transform_indices = @transform_2, window_bounds = array<i64: 1, 4, 2, 128>}, {transform_indices = @transform_3, window_bounds = array<i64: 1, 4, 2, 128>}, {transform_indices = @transform_4, window_bounds = array<i64: 1, 2, 2, 128>}, {transform_indices = @transform_5, window_bounds = array<i64: 1, 2, 2, 128>}, {transform_indices = @transform_6, window_bounds = array<i64: 1, 4, 2, 128>}]} {
    %c0 = arith.constant 0 : index
    %c0_0 = arith.constant 0 : index
    %c0_1 = arith.constant 0 : index
    %c0_2 = arith.constant 0 : index
    %0 = vector.load %arg4[%c0, %c0_0, %c0_1, %c0_2] : memref<1x4x2x128xf32, #tpu.memory_space<vmem>>, vector<1x1x2x128xf32>
    %1 = vector.shape_cast %0 : vector<1x1x2x128xf32> to vector<2x128xf32>
    %2 = arith.index_cast %arg0 : i32 to index
    %c0_3 = arith.constant 0 : index
    %3 = memref.load %arg2[%2, %c0_3] : memref<2x48xf32, #tpu.memory_space<smem>>
    %4 = vector.broadcast %3 : f32 to vector<2x128xf32>
    %5 = arith.mulf %1, %4 : vector<2x128xf32>
    %6 = arith.index_cast %arg0 : i32 to index
    %c1 = arith.constant 1 : index
    %7 = memref.load %arg2[%6, %c1] : memref<2x48xf32, #tpu.memory_space<smem>>
    %8 = vector.broadcast %7 : f32 to vector<2x128xf32>
    %9 = arith.mulf %1, %8 : vector<2x128xf32>
    %10 = arith.index_cast %arg0 : i32 to index
    %c2 = arith.constant 2 : index
    %11 = memref.load %arg2[%10, %c2] : memref<2x48xf32, #tpu.memory_space<smem>>
    %12 = vector.broadcast %11 : f32 to vector<2x128xf32>
    %13 = arith.mulf %1, %12 : vector<2x128xf32>
    %14 = arith.index_cast %arg0 : i32 to index
    %c3 = arith.constant 3 : index
    %15 = memref.load %arg2[%14, %c3] : memref<2x48xf32, #tpu.memory_space<smem>>
    %16 = vector.broadcast %15 : f32 to vector<2x128xf32>
    %17 = arith.mulf %1, %16 : vector<2x128xf32>
    %c0_4 = arith.constant 0 : index
    %c1_5 = arith.constant 1 : index
    %c0_6 = arith.constant 0 : index
    %c0_7 = arith.constant 0 : index
    %18 = vector.load %arg4[%c0_4, %c1_5, %c0_6, %c0_7] : memref<1x4x2x128xf32, #tpu.memory_space<vmem>>, vector<1x1x2x128xf32>
    %19 = vector.shape_cast %18 : vector<1x1x2x128xf32> to vector<2x128xf32>
    %20 = arith.index_cast %arg0 : i32 to index
    %c4 = arith.constant 4 : index
    %21 = memref.load %arg2[%20, %c4] : memref<2x48xf32, #tpu.memory_space<smem>>
    %22 = vector.broadcast %21 : f32 to vector<2x128xf32>
    %23 = arith.mulf %19, %22 : vector<2x128xf32>
    %24 = arith.addf %5, %23 : vector<2x128xf32>
    %25 = arith.index_cast %arg0 : i32 to index
    %c5 = arith.constant 5 : index
    %26 = memref.load %arg2[%25, %c5] : memref<2x48xf32, #tpu.memory_space<smem>>
    %27 = vector.broadcast %26 : f32 to vector<2x128xf32>
    %28 = arith.mulf %19, %27 : vector<2x128xf32>
    %29 = arith.addf %9, %28 : vector<2x128xf32>
    %30 = arith.index_cast %arg0 : i32 to index
    %c6 = arith.constant 6 : index
    %31 = memref.load %arg2[%30, %c6] : memref<2x48xf32, #tpu.memory_space<smem>>
    %32 = vector.broadcast %31 : f32 to vector<2x128xf32>
    %33 = arith.mulf %19, %32 : vector<2x128xf32>
    %34 = arith.addf %13, %33 : vector<2x128xf32>
    %35 = arith.index_cast %arg0 : i32 to index
    %c7 = arith.constant 7 : index
    %36 = memref.load %arg2[%35, %c7] : memref<2x48xf32, #tpu.memory_space<smem>>
    %37 = vector.broadcast %36 : f32 to vector<2x128xf32>
    %38 = arith.mulf %19, %37 : vector<2x128xf32>
    %39 = arith.addf %17, %38 : vector<2x128xf32>
    %c0_8 = arith.constant 0 : index
    %c2_9 = arith.constant 2 : index
    %c0_10 = arith.constant 0 : index
    %c0_11 = arith.constant 0 : index
    %40 = vector.load %arg4[%c0_8, %c2_9, %c0_10, %c0_11] : memref<1x4x2x128xf32, #tpu.memory_space<vmem>>, vector<1x1x2x128xf32>
    %41 = vector.shape_cast %40 : vector<1x1x2x128xf32> to vector<2x128xf32>
    %42 = arith.index_cast %arg0 : i32 to index
    %c8 = arith.constant 8 : index
    %43 = memref.load %arg2[%42, %c8] : memref<2x48xf32, #tpu.memory_space<smem>>
    %44 = vector.broadcast %43 : f32 to vector<2x128xf32>
    %45 = arith.mulf %41, %44 : vector<2x128xf32>
    %46 = arith.addf %24, %45 : vector<2x128xf32>
    %47 = arith.index_cast %arg0 : i32 to index
    %c9 = arith.constant 9 : index
    %48 = memref.load %arg2[%47, %c9] : memref<2x48xf32, #tpu.memory_space<smem>>
    %49 = vector.broadcast %48 : f32 to vector<2x128xf32>
    %50 = arith.mulf %41, %49 : vector<2x128xf32>
    %51 = arith.addf %29, %50 : vector<2x128xf32>
    %52 = arith.index_cast %arg0 : i32 to index
    %c10 = arith.constant 10 : index
    %53 = memref.load %arg2[%52, %c10] : memref<2x48xf32, #tpu.memory_space<smem>>
    %54 = vector.broadcast %53 : f32 to vector<2x128xf32>
    %55 = arith.mulf %41, %54 : vector<2x128xf32>
    %56 = arith.addf %34, %55 : vector<2x128xf32>
    %57 = arith.index_cast %arg0 : i32 to index
    %c11 = arith.constant 11 : index
    %58 = memref.load %arg2[%57, %c11] : memref<2x48xf32, #tpu.memory_space<smem>>
    %59 = vector.broadcast %58 : f32 to vector<2x128xf32>
    %60 = arith.mulf %41, %59 : vector<2x128xf32>
    %61 = arith.addf %39, %60 : vector<2x128xf32>
    %c0_12 = arith.constant 0 : index
    %c3_13 = arith.constant 3 : index
    %c0_14 = arith.constant 0 : index
    %c0_15 = arith.constant 0 : index
    %62 = vector.load %arg4[%c0_12, %c3_13, %c0_14, %c0_15] : memref<1x4x2x128xf32, #tpu.memory_space<vmem>>, vector<1x1x2x128xf32>
    %63 = vector.shape_cast %62 : vector<1x1x2x128xf32> to vector<2x128xf32>
    %64 = arith.index_cast %arg0 : i32 to index
    %c12 = arith.constant 12 : index
    %65 = memref.load %arg2[%64, %c12] : memref<2x48xf32, #tpu.memory_space<smem>>
    %66 = vector.broadcast %65 : f32 to vector<2x128xf32>
    %67 = arith.mulf %63, %66 : vector<2x128xf32>
    %68 = arith.addf %46, %67 : vector<2x128xf32>
    %69 = arith.index_cast %arg0 : i32 to index
    %c13 = arith.constant 13 : index
    %70 = memref.load %arg2[%69, %c13] : memref<2x48xf32, #tpu.memory_space<smem>>
    %71 = vector.broadcast %70 : f32 to vector<2x128xf32>
    %72 = arith.mulf %63, %71 : vector<2x128xf32>
    %73 = arith.addf %51, %72 : vector<2x128xf32>
    %74 = arith.index_cast %arg0 : i32 to index
    %c14 = arith.constant 14 : index
    %75 = memref.load %arg2[%74, %c14] : memref<2x48xf32, #tpu.memory_space<smem>>
    %76 = vector.broadcast %75 : f32 to vector<2x128xf32>
    %77 = arith.mulf %63, %76 : vector<2x128xf32>
    %78 = arith.addf %56, %77 : vector<2x128xf32>
    %79 = arith.index_cast %arg0 : i32 to index
    %c15 = arith.constant 15 : index
    %80 = memref.load %arg2[%79, %c15] : memref<2x48xf32, #tpu.memory_space<smem>>
    %81 = vector.broadcast %80 : f32 to vector<2x128xf32>
    %82 = arith.mulf %63, %81 : vector<2x128xf32>
    %83 = arith.addf %61, %82 : vector<2x128xf32>
    %c0_16 = arith.constant 0 : index
    %c0_17 = arith.constant 0 : index
    %c0_18 = arith.constant 0 : index
    %c0_19 = arith.constant 0 : index
    %84 = vector.load %arg5[%c0_16, %c0_17, %c0_18, %c0_19] : memref<1x4x2x128xf32, #tpu.memory_space<vmem>>, vector<1x1x2x128xf32>
    %85 = vector.shape_cast %84 : vector<1x1x2x128xf32> to vector<2x128xf32>
    %86 = arith.index_cast %arg0 : i32 to index
    %c16 = arith.constant 16 : index
    %87 = memref.load %arg2[%86, %c16] : memref<2x48xf32, #tpu.memory_space<smem>>
    %88 = vector.broadcast %87 : f32 to vector<2x128xf32>
    %89 = arith.mulf %85, %88 : vector<2x128xf32>
    %90 = arith.addf %68, %89 : vector<2x128xf32>
    %91 = arith.index_cast %arg0 : i32 to index
    %c17 = arith.constant 17 : index
    %92 = memref.load %arg2[%91, %c17] : memref<2x48xf32, #tpu.memory_space<smem>>
    %93 = vector.broadcast %92 : f32 to vector<2x128xf32>
    %94 = arith.mulf %85, %93 : vector<2x128xf32>
    %95 = arith.addf %73, %94 : vector<2x128xf32>
    %96 = arith.index_cast %arg0 : i32 to index
    %c18 = arith.constant 18 : index
    %97 = memref.load %arg2[%96, %c18] : memref<2x48xf32, #tpu.memory_space<smem>>
    %98 = vector.broadcast %97 : f32 to vector<2x128xf32>
    %99 = arith.mulf %85, %98 : vector<2x128xf32>
    %100 = arith.addf %78, %99 : vector<2x128xf32>
    %101 = arith.index_cast %arg0 : i32 to index
    %c19 = arith.constant 19 : index
    %102 = memref.load %arg2[%101, %c19] : memref<2x48xf32, #tpu.memory_space<smem>>
    %103 = vector.broadcast %102 : f32 to vector<2x128xf32>
    %104 = arith.mulf %85, %103 : vector<2x128xf32>
    %105 = arith.addf %83, %104 : vector<2x128xf32>
    %c0_20 = arith.constant 0 : index
    %c1_21 = arith.constant 1 : index
    %c0_22 = arith.constant 0 : index
    %c0_23 = arith.constant 0 : index
    %106 = vector.load %arg5[%c0_20, %c1_21, %c0_22, %c0_23] : memref<1x4x2x128xf32, #tpu.memory_space<vmem>>, vector<1x1x2x128xf32>
    %107 = vector.shape_cast %106 : vector<1x1x2x128xf32> to vector<2x128xf32>
    %108 = arith.index_cast %arg0 : i32 to index
    %c20 = arith.constant 20 : index
    %109 = memref.load %arg2[%108, %c20] : memref<2x48xf32, #tpu.memory_space<smem>>
    %110 = vector.broadcast %109 : f32 to vector<2x128xf32>
    %111 = arith.mulf %107, %110 : vector<2x128xf32>
    %112 = arith.addf %90, %111 : vector<2x128xf32>
    %113 = arith.index_cast %arg0 : i32 to index
    %c21 = arith.constant 21 : index
    %114 = memref.load %arg2[%113, %c21] : memref<2x48xf32, #tpu.memory_space<smem>>
    %115 = vector.broadcast %114 : f32 to vector<2x128xf32>
    %116 = arith.mulf %107, %115 : vector<2x128xf32>
    %117 = arith.addf %95, %116 : vector<2x128xf32>
    %118 = arith.index_cast %arg0 : i32 to index
    %c22 = arith.constant 22 : index
    %119 = memref.load %arg2[%118, %c22] : memref<2x48xf32, #tpu.memory_space<smem>>
    %120 = vector.broadcast %119 : f32 to vector<2x128xf32>
    %121 = arith.mulf %107, %120 : vector<2x128xf32>
    %122 = arith.addf %100, %121 : vector<2x128xf32>
    %123 = arith.index_cast %arg0 : i32 to index
    %c23 = arith.constant 23 : index
    %124 = memref.load %arg2[%123, %c23] : memref<2x48xf32, #tpu.memory_space<smem>>
    %125 = vector.broadcast %124 : f32 to vector<2x128xf32>
    %126 = arith.mulf %107, %125 : vector<2x128xf32>
    %127 = arith.addf %105, %126 : vector<2x128xf32>
    %c0_24 = arith.constant 0 : index
    %c2_25 = arith.constant 2 : index
    %c0_26 = arith.constant 0 : index
    %c0_27 = arith.constant 0 : index
    %128 = vector.load %arg5[%c0_24, %c2_25, %c0_26, %c0_27] : memref<1x4x2x128xf32, #tpu.memory_space<vmem>>, vector<1x1x2x128xf32>
    %129 = vector.shape_cast %128 : vector<1x1x2x128xf32> to vector<2x128xf32>
    %130 = arith.index_cast %arg0 : i32 to index
    %c24 = arith.constant 24 : index
    %131 = memref.load %arg2[%130, %c24] : memref<2x48xf32, #tpu.memory_space<smem>>
    %132 = vector.broadcast %131 : f32 to vector<2x128xf32>
    %133 = arith.mulf %129, %132 : vector<2x128xf32>
    %134 = arith.addf %112, %133 : vector<2x128xf32>
    %135 = arith.index_cast %arg0 : i32 to index
    %c25 = arith.constant 25 : index
    %136 = memref.load %arg2[%135, %c25] : memref<2x48xf32, #tpu.memory_space<smem>>
    %137 = vector.broadcast %136 : f32 to vector<2x128xf32>
    %138 = arith.mulf %129, %137 : vector<2x128xf32>
    %139 = arith.addf %117, %138 : vector<2x128xf32>
    %140 = arith.index_cast %arg0 : i32 to index
    %c26 = arith.constant 26 : index
    %141 = memref.load %arg2[%140, %c26] : memref<2x48xf32, #tpu.memory_space<smem>>
    %142 = vector.broadcast %141 : f32 to vector<2x128xf32>
    %143 = arith.mulf %129, %142 : vector<2x128xf32>
    %144 = arith.addf %122, %143 : vector<2x128xf32>
    %145 = arith.index_cast %arg0 : i32 to index
    %c27 = arith.constant 27 : index
    %146 = memref.load %arg2[%145, %c27] : memref<2x48xf32, #tpu.memory_space<smem>>
    %147 = vector.broadcast %146 : f32 to vector<2x128xf32>
    %148 = arith.mulf %129, %147 : vector<2x128xf32>
    %149 = arith.addf %127, %148 : vector<2x128xf32>
    %c0_28 = arith.constant 0 : index
    %c3_29 = arith.constant 3 : index
    %c0_30 = arith.constant 0 : index
    %c0_31 = arith.constant 0 : index
    %150 = vector.load %arg5[%c0_28, %c3_29, %c0_30, %c0_31] : memref<1x4x2x128xf32, #tpu.memory_space<vmem>>, vector<1x1x2x128xf32>
    %151 = vector.shape_cast %150 : vector<1x1x2x128xf32> to vector<2x128xf32>
    %152 = arith.index_cast %arg0 : i32 to index
    %c28 = arith.constant 28 : index
    %153 = memref.load %arg2[%152, %c28] : memref<2x48xf32, #tpu.memory_space<smem>>
    %154 = vector.broadcast %153 : f32 to vector<2x128xf32>
    %155 = arith.mulf %151, %154 : vector<2x128xf32>
    %156 = arith.addf %134, %155 : vector<2x128xf32>
    %157 = arith.index_cast %arg0 : i32 to index
    %c29 = arith.constant 29 : index
    %158 = memref.load %arg2[%157, %c29] : memref<2x48xf32, #tpu.memory_space<smem>>
    %159 = vector.broadcast %158 : f32 to vector<2x128xf32>
    %160 = arith.mulf %151, %159 : vector<2x128xf32>
    %161 = arith.addf %139, %160 : vector<2x128xf32>
    %162 = arith.index_cast %arg0 : i32 to index
    %c30 = arith.constant 30 : index
    %163 = memref.load %arg2[%162, %c30] : memref<2x48xf32, #tpu.memory_space<smem>>
    %164 = vector.broadcast %163 : f32 to vector<2x128xf32>
    %165 = arith.mulf %151, %164 : vector<2x128xf32>
    %166 = arith.addf %144, %165 : vector<2x128xf32>
    %167 = arith.index_cast %arg0 : i32 to index
    %c31 = arith.constant 31 : index
    %168 = memref.load %arg2[%167, %c31] : memref<2x48xf32, #tpu.memory_space<smem>>
    %169 = vector.broadcast %168 : f32 to vector<2x128xf32>
    %170 = arith.mulf %151, %169 : vector<2x128xf32>
    %171 = arith.addf %149, %170 : vector<2x128xf32>
    %c0_32 = arith.constant 0 : index
    %c0_33 = arith.constant 0 : index
    %c0_34 = arith.constant 0 : index
    %c0_35 = arith.constant 0 : index
    %172 = vector.load %arg6[%c0_32, %c0_33, %c0_34, %c0_35] : memref<1x2x2x128xf32, #tpu.memory_space<vmem>>, vector<1x1x2x128xf32>
    %173 = vector.shape_cast %172 : vector<1x1x2x128xf32> to vector<2x128xf32>
    %174 = arith.index_cast %arg0 : i32 to index
    %c32 = arith.constant 32 : index
    %175 = memref.load %arg2[%174, %c32] : memref<2x48xf32, #tpu.memory_space<smem>>
    %176 = vector.broadcast %175 : f32 to vector<2x128xf32>
    %177 = arith.mulf %173, %176 : vector<2x128xf32>
    %178 = arith.addf %156, %177 : vector<2x128xf32>
    %179 = arith.index_cast %arg0 : i32 to index
    %c33 = arith.constant 33 : index
    %180 = memref.load %arg2[%179, %c33] : memref<2x48xf32, #tpu.memory_space<smem>>
    %181 = vector.broadcast %180 : f32 to vector<2x128xf32>
    %182 = arith.mulf %173, %181 : vector<2x128xf32>
    %183 = arith.addf %161, %182 : vector<2x128xf32>
    %184 = arith.index_cast %arg0 : i32 to index
    %c34 = arith.constant 34 : index
    %185 = memref.load %arg2[%184, %c34] : memref<2x48xf32, #tpu.memory_space<smem>>
    %186 = vector.broadcast %185 : f32 to vector<2x128xf32>
    %187 = arith.mulf %173, %186 : vector<2x128xf32>
    %188 = arith.addf %166, %187 : vector<2x128xf32>
    %189 = arith.index_cast %arg0 : i32 to index
    %c35 = arith.constant 35 : index
    %190 = memref.load %arg2[%189, %c35] : memref<2x48xf32, #tpu.memory_space<smem>>
    %191 = vector.broadcast %190 : f32 to vector<2x128xf32>
    %192 = arith.mulf %173, %191 : vector<2x128xf32>
    %193 = arith.addf %171, %192 : vector<2x128xf32>
    %c0_36 = arith.constant 0 : index
    %c1_37 = arith.constant 1 : index
    %c0_38 = arith.constant 0 : index
    %c0_39 = arith.constant 0 : index
    %194 = vector.load %arg6[%c0_36, %c1_37, %c0_38, %c0_39] : memref<1x2x2x128xf32, #tpu.memory_space<vmem>>, vector<1x1x2x128xf32>
    %195 = vector.shape_cast %194 : vector<1x1x2x128xf32> to vector<2x128xf32>
    %196 = arith.index_cast %arg0 : i32 to index
    %c36 = arith.constant 36 : index
    %197 = memref.load %arg2[%196, %c36] : memref<2x48xf32, #tpu.memory_space<smem>>
    %198 = vector.broadcast %197 : f32 to vector<2x128xf32>
    %199 = arith.mulf %195, %198 : vector<2x128xf32>
    %200 = arith.addf %178, %199 : vector<2x128xf32>
    %201 = arith.index_cast %arg0 : i32 to index
    %c37 = arith.constant 37 : index
    %202 = memref.load %arg2[%201, %c37] : memref<2x48xf32, #tpu.memory_space<smem>>
    %203 = vector.broadcast %202 : f32 to vector<2x128xf32>
    %204 = arith.mulf %195, %203 : vector<2x128xf32>
    %205 = arith.addf %183, %204 : vector<2x128xf32>
    %206 = arith.index_cast %arg0 : i32 to index
    %c38 = arith.constant 38 : index
    %207 = memref.load %arg2[%206, %c38] : memref<2x48xf32, #tpu.memory_space<smem>>
    %208 = vector.broadcast %207 : f32 to vector<2x128xf32>
    %209 = arith.mulf %195, %208 : vector<2x128xf32>
    %210 = arith.addf %188, %209 : vector<2x128xf32>
    %211 = arith.index_cast %arg0 : i32 to index
    %c39 = arith.constant 39 : index
    %212 = memref.load %arg2[%211, %c39] : memref<2x48xf32, #tpu.memory_space<smem>>
    %213 = vector.broadcast %212 : f32 to vector<2x128xf32>
    %214 = arith.mulf %195, %213 : vector<2x128xf32>
    %215 = arith.addf %193, %214 : vector<2x128xf32>
    %c0_40 = arith.constant 0 : index
    %c0_41 = arith.constant 0 : index
    %c0_42 = arith.constant 0 : index
    %c0_43 = arith.constant 0 : index
    %216 = vector.load %arg7[%c0_40, %c0_41, %c0_42, %c0_43] : memref<1x2x2x128xf32, #tpu.memory_space<vmem>>, vector<1x1x2x128xf32>
    %217 = vector.shape_cast %216 : vector<1x1x2x128xf32> to vector<2x128xf32>
    %218 = arith.index_cast %arg0 : i32 to index
    %c40 = arith.constant 40 : index
    %219 = memref.load %arg2[%218, %c40] : memref<2x48xf32, #tpu.memory_space<smem>>
    %220 = vector.broadcast %219 : f32 to vector<2x128xf32>
    %221 = arith.mulf %217, %220 : vector<2x128xf32>
    %222 = arith.addf %200, %221 : vector<2x128xf32>
    %223 = arith.index_cast %arg0 : i32 to index
    %c41 = arith.constant 41 : index
    %224 = memref.load %arg2[%223, %c41] : memref<2x48xf32, #tpu.memory_space<smem>>
    %225 = vector.broadcast %224 : f32 to vector<2x128xf32>
    %226 = arith.mulf %217, %225 : vector<2x128xf32>
    %227 = arith.addf %205, %226 : vector<2x128xf32>
    %228 = arith.index_cast %arg0 : i32 to index
    %c42 = arith.constant 42 : index
    %229 = memref.load %arg2[%228, %c42] : memref<2x48xf32, #tpu.memory_space<smem>>
    %230 = vector.broadcast %229 : f32 to vector<2x128xf32>
    %231 = arith.mulf %217, %230 : vector<2x128xf32>
    %232 = arith.addf %210, %231 : vector<2x128xf32>
    %233 = arith.index_cast %arg0 : i32 to index
    %c43 = arith.constant 43 : index
    %234 = memref.load %arg2[%233, %c43] : memref<2x48xf32, #tpu.memory_space<smem>>
    %235 = vector.broadcast %234 : f32 to vector<2x128xf32>
    %236 = arith.mulf %217, %235 : vector<2x128xf32>
    %237 = arith.addf %215, %236 : vector<2x128xf32>
    %c0_44 = arith.constant 0 : index
    %c1_45 = arith.constant 1 : index
    %c0_46 = arith.constant 0 : index
    %c0_47 = arith.constant 0 : index
    %238 = vector.load %arg7[%c0_44, %c1_45, %c0_46, %c0_47] : memref<1x2x2x128xf32, #tpu.memory_space<vmem>>, vector<1x1x2x128xf32>
    %239 = vector.shape_cast %238 : vector<1x1x2x128xf32> to vector<2x128xf32>
    %240 = arith.index_cast %arg0 : i32 to index
    %c44 = arith.constant 44 : index
    %241 = memref.load %arg2[%240, %c44] : memref<2x48xf32, #tpu.memory_space<smem>>
    %242 = vector.broadcast %241 : f32 to vector<2x128xf32>
    %243 = arith.mulf %239, %242 : vector<2x128xf32>
    %244 = arith.addf %222, %243 : vector<2x128xf32>
    %245 = arith.index_cast %arg0 : i32 to index
    %c45 = arith.constant 45 : index
    %246 = memref.load %arg2[%245, %c45] : memref<2x48xf32, #tpu.memory_space<smem>>
    %247 = vector.broadcast %246 : f32 to vector<2x128xf32>
    %248 = arith.mulf %239, %247 : vector<2x128xf32>
    %249 = arith.addf %227, %248 : vector<2x128xf32>
    %250 = arith.index_cast %arg0 : i32 to index
    %c46 = arith.constant 46 : index
    %251 = memref.load %arg2[%250, %c46] : memref<2x48xf32, #tpu.memory_space<smem>>
    %252 = vector.broadcast %251 : f32 to vector<2x128xf32>
    %253 = arith.mulf %239, %252 : vector<2x128xf32>
    %254 = arith.addf %232, %253 : vector<2x128xf32>
    %255 = arith.index_cast %arg0 : i32 to index
    %c47 = arith.constant 47 : index
    %256 = memref.load %arg2[%255, %c47] : memref<2x48xf32, #tpu.memory_space<smem>>
    %257 = vector.broadcast %256 : f32 to vector<2x128xf32>
    %258 = arith.mulf %239, %257 : vector<2x128xf32>
    %259 = arith.addf %237, %258 : vector<2x128xf32>
    %260 = arith.index_cast %arg0 : i32 to index
    %c0_48 = arith.constant 0 : index
    %261 = memref.load %arg3[%260, %c0_48] : memref<2x4xf32, #tpu.memory_space<smem>>
    %262 = vector.broadcast %261 : f32 to vector<2x128xf32>
    %263 = arith.addf %244, %262 : vector<2x128xf32>
    %c0_49 = arith.constant 0 : index
    %c0_50 = arith.constant 0 : index
    %c0_51 = arith.constant 0 : index
    %c0_52 = arith.constant 0 : index
    %264 = vector.load %arg8[%c0_49, %c0_50, %c0_51, %c0_52] : memref<1x4x2x128xf32, #tpu.memory_space<vmem>>, vector<1x1x2x128xf32>
    %265 = vector.shape_cast %264 : vector<1x1x2x128xf32> to vector<2x128xf32>
    %266 = vector.shape_cast %263 : vector<2x128xf32> to vector<1x1x2x128xf32>
    tpu.vector_store %arg8[%c0_49, %c0_50, %c0_51, %c0_52], %266 {strides = array<i32>} : memref<1x4x2x128xf32, #tpu.memory_space<vmem>>, vector<1x1x2x128xf32>,
    %267 = arith.index_cast %arg0 : i32 to index
    %c1_53 = arith.constant 1 : index
    %268 = memref.load %arg3[%267, %c1_53] : memref<2x4xf32, #tpu.memory_space<smem>>
    %269 = vector.broadcast %268 : f32 to vector<2x128xf32>
    %270 = arith.addf %249, %269 : vector<2x128xf32>
    %c0_54 = arith.constant 0 : index
    %c1_55 = arith.constant 1 : index
    %c0_56 = arith.constant 0 : index
    %c0_57 = arith.constant 0 : index
    %271 = vector.load %arg8[%c0_54, %c1_55, %c0_56, %c0_57] : memref<1x4x2x128xf32, #tpu.memory_space<vmem>>, vector<1x1x2x128xf32>
    %272 = vector.shape_cast %271 : vector<1x1x2x128xf32> to vector<2x128xf32>
    %273 = vector.shape_cast %270 : vector<2x128xf32> to vector<1x1x2x128xf32>
    tpu.vector_store %arg8[%c0_54, %c1_55, %c0_56, %c0_57], %273 {strides = array<i32>} : memref<1x4x2x128xf32, #tpu.memory_space<vmem>>, vector<1x1x2x128xf32>,
    %274 = arith.index_cast %arg0 : i32 to index
    %c2_58 = arith.constant 2 : index
    %275 = memref.load %arg3[%274, %c2_58] : memref<2x4xf32, #tpu.memory_space<smem>>
    %276 = vector.broadcast %275 : f32 to vector<2x128xf32>
    %277 = arith.addf %254, %276 : vector<2x128xf32>
    %c0_59 = arith.constant 0 : index
    %c2_60 = arith.constant 2 : index
    %c0_61 = arith.constant 0 : index
    %c0_62 = arith.constant 0 : index
    %278 = vector.load %arg8[%c0_59, %c2_60, %c0_61, %c0_62] : memref<1x4x2x128xf32, #tpu.memory_space<vmem>>, vector<1x1x2x128xf32>
    %279 = vector.shape_cast %278 : vector<1x1x2x128xf32> to vector<2x128xf32>
    %280 = vector.shape_cast %277 : vector<2x128xf32> to vector<1x1x2x128xf32>
    tpu.vector_store %arg8[%c0_59, %c2_60, %c0_61, %c0_62], %280 {strides = array<i32>} : memref<1x4x2x128xf32, #tpu.memory_space<vmem>>, vector<1x1x2x128xf32>,
    %281 = arith.index_cast %arg0 : i32 to index
    %c3_63 = arith.constant 3 : index
    %282 = memref.load %arg3[%281, %c3_63] : memref<2x4xf32, #tpu.memory_space<smem>>
    %283 = vector.broadcast %282 : f32 to vector<2x128xf32>
    %284 = arith.addf %259, %283 : vector<2x128xf32>
    %c0_64 = arith.constant 0 : index
    %c3_65 = arith.constant 3 : index
    %c0_66 = arith.constant 0 : index
    %c0_67 = arith.constant 0 : index
    %285 = vector.load %arg8[%c0_64, %c3_65, %c0_66, %c0_67] : memref<1x4x2x128xf32, #tpu.memory_space<vmem>>, vector<1x1x2x128xf32>
    %286 = vector.shape_cast %285 : vector<1x1x2x128xf32> to vector<2x128xf32>
    %287 = vector.shape_cast %284 : vector<2x128xf32> to vector<1x1x2x128xf32>
    tpu.vector_store %arg8[%c0_64, %c3_65, %c0_66, %c0_67], %287 {strides = array<i32>} : memref<1x4x2x128xf32, #tpu.memory_space<vmem>>, vector<1x1x2x128xf32>,
    return
  }
  func.func @transform_0(%arg0: i32, %arg1: i32) -> (i32, i32) {
    %c0_i32 = arith.constant 0 : i32
    %c0_i32_0 = arith.constant 0 : i32
    %c0_i32_1 = arith.constant 0 : i32
    return %c0_i32, %c0_i32_0 : i32, i32
  }
  func.func @transform_1(%arg0: i32, %arg1: i32) -> (i32, i32) {
    %c0_i32 = arith.constant 0 : i32
    %c0_i32_0 = arith.constant 0 : i32
    %c0_i32_1 = arith.constant 0 : i32
    return %c0_i32, %c0_i32_0 : i32, i32
  }
  func.func @transform_2(%arg0: i32, %arg1: i32) -> (i32, i32, i32, i32) {
    %c0_i32 = arith.constant 0 : i32
    %c0_i32_0 = arith.constant 0 : i32
    %c0_i32_1 = arith.constant 0 : i32
    return %arg0, %c0_i32, %arg1, %c0_i32_0 : i32, i32, i32, i32
  }
  func.func @transform_3(%arg0: i32, %arg1: i32) -> (i32, i32, i32, i32) {
    %c0_i32 = arith.constant 0 : i32
    %c0_i32_0 = arith.constant 0 : i32
    %c0_i32_1 = arith.constant 0 : i32
    return %arg0, %c0_i32, %arg1, %c0_i32_0 : i32, i32, i32, i32
  }
  func.func @transform_4(%arg0: i32, %arg1: i32) -> (i32, i32, i32, i32) {
    %c0_i32 = arith.constant 0 : i32
    %c0_i32_0 = arith.constant 0 : i32
    %c0_i32_1 = arith.constant 0 : i32
    return %arg0, %c0_i32, %arg1, %c0_i32_0 : i32, i32, i32, i32
  }
  func.func @transform_5(%arg0: i32, %arg1: i32) -> (i32, i32, i32, i32) {
    %c0_i32 = arith.constant 0 : i32
    %c0_i32_0 = arith.constant 0 : i32
    %c0_i32_1 = arith.constant 0 : i32
    return %arg0, %c0_i32, %arg1, %c0_i32_0 : i32, i32, i32, i32
  }
  func.func @transform_6(%arg0: i32, %arg1: i32) -> (i32, i32, i32, i32) {
    %c0_i32 = arith.constant 0 : i32
    %c0_i32_0 = arith.constant 0 : i32
    %c0_i32_1 = arith.constant 0 : i32
    return %arg0, %c0_i32, %arg1, %c0_i32_0 : i32, i32, i32, i32
  }
}

</mosaic_0001>

<llo_original>
// kernel: tpu_custom_call.1
$region0: #{tpu_custom_call.1}
  #allocation0 [shape = 'u32[]', space=smem, size = 0x4, offset = 0x4, fixed_abs, tag = 'smem constant byte address 0x4 - core index']
  #allocation1 [shape = 'u32[72,128]{1,0:T(1,128)}', space=vmem, size = 0x9000, scoped, tag = 'internal scratch']
  %s0 = inlined_call_operand.hbm [shape: f32[2,48], index: 0, kind: input, shape index: {}]
  %s1 = inlined_call_operand.hbm [shape: f32[2,4], index: 1, kind: input, shape index: {}]
  %s2 = inlined_call_operand.hbm [shape: f32[2,4,2,128], index: 2, kind: input, shape index: {}]
  %s3 = inlined_call_operand.hbm [shape: f32[2,4,2,128], index: 3, kind: input, shape index: {}]
  %s4 = inlined_call_operand.hbm [shape: f32[2,2,2,128], index: 4, kind: input, shape index: {}]
  %s5 = inlined_call_operand.hbm [shape: f32[2,2,2,128], index: 5, kind: input, shape index: {}]
  %s6 = inlined_call_operand.hbm [shape: f32[2,4,2,128], index: 6, kind: output, shape index: {}]
  %s7 = sld [smem:[#allocation0]]
  $region81: #{tpu_custom_call.1} parent=0
    _
  %s9 = ssub.s32 1, %s7
  %s10 = scalar_select 0, %s9, %s7
  $region1: #{tpu_custom_call.1} parent=0
    #allocation2 [shape = 'u8[1024]{0}', space=smem, size = 0x400, scoped, tag = 'input window, operand 0, single buffered']
    #allocation3 [shape = 's32[2]{0}', space=sflag, size = 0x8, scoped, tag = 'scoped memory for tpu_custom_call.1']
    #allocation4 [shape = 's32[2]{0}', space=sflag, size = 0x8, scoped, tag = 'scoped memory for tpu_custom_call.1']
    #allocation5 [shape = 's32[2]{0}', space=sflag, size = 0x8, scoped, tag = 'scoped memory for tpu_custom_call.1']
    #allocation6 [shape = 'u8[1024]{0}', space=smem, size = 0x400, scoped, tag = 'input window, operand 1, single buffered']
    #allocation7 [shape = 's32[1]{0}', space=sflag, size = 0x4, scoped, tag = 'scoped memory for tpu_custom_call.1']
    #allocation8 [shape = 'u8[8192]{0}', space=vmem, size = 0x2000, scoped, tag = 'input window, operand 2']
    #allocation9 [shape = 'u8[8192]{0}', space=vmem, size = 0x2000, scoped, tag = 'input window, operand 3']
    #allocation10 [shape = 's32[2]{0}', space=sflag, size = 0x8, scoped, tag = 'scoped memory for tpu_custom_call.1']
    #allocation11 [shape = 'u8[4096]{0}', space=vmem, size = 0x1000, scoped, tag = 'input window, operand 4']
    #allocation12 [shape = 'u8[4096]{0}', space=vmem, size = 0x1000, scoped, tag = 'input window, operand 5']
    #allocation13 [shape = 's32[2]{0}', space=sflag, size = 0x8, scoped, tag = 'scoped memory for tpu_custom_call.1']
    #allocation14 [shape = 'u8[8192]{0}', space=vmem, size = 0x2000, scoped, tag = 'output window, operand 0']
    %11 = vsyncpa [#allocation5], 0
    %12 = vsyncpa [#allocation7], 0
    %13 = vsyncpa [#allocation3], 0
    %s14 = scalar_lea.sflag [#allocation3], 1
    %15 = vsyncpa %s14, 0
    %16 = vsyncpa [#allocation10], 0
    %s17 = scalar_lea.sflag [#allocation10], 1
    %18 = vsyncpa %s17, 0
    %19 = vsyncpa [#allocation13], 0
    %s20 = scalar_lea.sflag [#allocation13], 1
    %21 = vsyncpa %s20, 0
    %22 = vsyncpa [#allocation4], 0
    %s23 = scalar_lea.sflag [#allocation4], 1
    %24 = vsyncpa %s23, 0
    loop: start=0, step=1, limit=4
    $region2: #{tpu_custom_call.1} parent=1 // loop_pre_header
      _
    $region3: #{tpu_custom_call.1} parent=1 // loop_header
      %s26 = sphi 0, %s30
      %p27 = scmp.ge.s32.totalorder %s26, 4
      %s33 = sphi 0, %s45
      %s34 = sphi 0, %s41
      %s35 = sphi 0, %s33
      %s36 = sphi 0, %s34
      %s37 = sphi 0, %s35
      %s38 = sphi 0, %s36
      %s46 = sphi 0, %s46
      %s48 = sphi 0, %s46
      %s49 = sphi 0, %s48
      %s63 = sphi 0, %s49
      %s67 = sphi 0, %s67
      %s69 = sphi 0, %s67
      %s70 = sphi 0, %s69
      %s84 = sphi 0, %s70
      %s92 = sphi 0, %s94
      %s95 = sphi 0, %s92
      %s96 = sphi 0, %s95
      %s112 = sphi 0, %s96
      %s120 = sphi 0, %s122
      %s123 = sphi 0, %s120
      %s124 = sphi 0, %s123
      %s140 = sphi 0, %s124
      %s148 = sphi 0, %s150
      %s151 = sphi 0, %s148
      %s152 = sphi 0, %s151
      %s168 = sphi 0, %s152
      %s176 = sphi 0, %s178
      %s179 = sphi 0, %s176
      %s180 = sphi 0, %s179
      %s196 = sphi 0, %s180
      %s204 = sphi 0, %s206
      %s207 = sphi 0, %s204
      %s208 = sphi 0, %s207
      %s224 = sphi 0, %s208
    $region4: #{tpu_custom_call.1} parent=1 // loop_header_branch
      %29 = sbr.rel (%p27) target = $region8
    $region5: #{tpu_custom_call.1} parent=1 // loop_body
      %s31 = ssub.s32 %s26, 1
      %s32 = ssub.s32 %s26, 2
      %s39 = sadd.s32 1, %s34
      %p40 = scmp.ge.s32.totalorder %s39, 1
      %s41 = scalar_select %p40, 0, %s39
      %s42 = sadd.s32 1, %s33
      %s43 = scalar_select %p40, %s42, %s33
      %p44 = scmp.ge.s32.totalorder %s43, 2
      %s45 = scalar_select %p44, 0, %s43
      %s47 = sadd.s32 %s46, 1
      %p50 = scmp.eq.s32.totalorder %s26, 1
      %p51 = scmp.ne.s32.totalorder %s46, %s48
      %p52 = scmp.eq.s32.totalorder %s26, 0
      %p53 = por %p51, %p52
      %p54 = scmp.ne.s32.totalorder %s46, %s48
      %p55 = scmp.eq.s32.totalorder %s31, 1
      %p56 = por %p54, %p55
      %p57 = scmp.ne.s32.totalorder %s48, %s49
      %p58 = scmp.eq.s32.totalorder %s31, 0
      %p59 = por %p57, %p58
      %p60 = scmp.ne.s32.totalorder %s48, %s49
      %p61 = scmp.eq.s32.totalorder %s32, 1
      %p62 = por %p60, %p61
      %p64 = scmp.ne.s32.totalorder %s49, %s63
      %p65 = scmp.eq.s32.totalorder %s32, 0
      %p66 = por %p64, %p65
      %s68 = sadd.s32 %s67, 1
      %p71 = scmp.eq.s32.totalorder %s26, 1
      %p72 = scmp.ne.s32.totalorder %s67, %s69
      %p73 = scmp.eq.s32.totalorder %s26, 0
      %p74 = por %p72, %p73
      %p75 = scmp.ne.s32.totalorder %s67, %s69
      %p76 = scmp.eq.s32.totalorder %s31, 1
      %p77 = por %p75, %p76
      %p78 = scmp.ne.s32.totalorder %s69, %s70
      %p79 = scmp.eq.s32.totalorder %s31, 0
      %p80 = por %p78, %p79
      %p81 = scmp.ne.s32.totalorder %s69, %s70
      %p82 = scmp.eq.s32.totalorder %s32, 1
      %p83 = por %p81, %p82
      %p85 = scmp.ne.s32.totalorder %s70, %s84
      %p86 = scmp.eq.s32.totalorder %s32, 0
      %p87 = por %p85, %p86
      %s88 = ssub.s32 %s33, %s45
      %s89 = ssub.s32 %s34, %s41
      %s90 = sor.u32 %s88, %s89
      %p91 = scmp.eq.s32.totalorder %s90, 0
      %s93 = sadd.s32 %s92, 1
      %s94 = scalar_select %p91, %s92, %s93
      %p97 = pneg %p91
      %p98 = scmp.eq.s32.totalorder %s26, 1
      %p99 = por %p97, %p98
      %p100 = scmp.ne.s32.totalorder %s92, %s95
      %p101 = scmp.eq.s32.totalorder %s26, 0
      %p102 = por %p100, %p101
      %p103 = scmp.ne.s32.totalorder %s92, %s95
      %p104 = scmp.eq.s32.totalorder %s31, 1
      %p105 = por %p103, %p104
      %p106 = scmp.ne.s32.totalorder %s95, %s96
      %p107 = scmp.eq.s32.totalorder %s31, 0
      %p108 = por %p106, %p107
      %p109 = scmp.ne.s32.totalorder %s95, %s96
      %p110 = scmp.eq.s32.totalorder %s32, 1
      %p111 = por %p109, %p110
      %p113 = scmp.ne.s32.totalorder %s96, %s112
      %p114 = scmp.eq.s32.totalorder %s32, 0
      %p115 = por %p113, %p114
      %s116 = ssub.s32 %s33, %s45
      %s117 = ssub.s32 %s34, %s41
      %s118 = sor.u32 %s116, %s117
      %p119 = scmp.eq.s32.totalorder %s118, 0
      %s121 = sadd.s32 %s120, 1
      %s122 = scalar_select %p119, %s120, %s121
      %p125 = pneg %p119
      %p126 = scmp.eq.s32.totalorder %s26, 1
      %p127 = por %p125, %p126
      %p128 = scmp.ne.s32.totalorder %s120, %s123
      %p129 = scmp.eq.s32.totalorder %s26, 0
      %p130 = por %p128, %p129
      %p131 = scmp.ne.s32.totalorder %s120, %s123
      %p132 = scmp.eq.s32.totalorder %s31, 1
      %p133 = por %p131, %p132
      %p134 = scmp.ne.s32.totalorder %s123, %s124
      %p135 = scmp.eq.s32.totalorder %s31, 0
      %p136 = por %p134, %p135
      %p137 = scmp.ne.s32.totalorder %s123, %s124
      %p138 = scmp.eq.s32.totalorder %s32, 1
      %p139 = por %p137, %p138
      %p141 = scmp.ne.s32.totalorder %s124, %s140
      %p142 = scmp.eq.s32.totalorder %s32, 0
      %p143 = por %p141, %p142
      %s144 = ssub.s32 %s33, %s45
      %s145 = ssub.s32 %s34, %s41
      %s146 = sor.u32 %s144, %s145
      %p147 = scmp.eq.s32.totalorder %s146, 0
      %s149 = sadd.s32 %s148, 1
      %s150 = scalar_select %p147, %s148, %s149
      %p153 = pneg %p147
      %p154 = scmp.eq.s32.totalorder %s26, 1
      %p155 = por %p153, %p154
      %p156 = scmp.ne.s32.totalorder %s148, %s151
      %p157 = scmp.eq.s32.totalorder %s26, 0
      %p158 = por %p156, %p157
      %p159 = scmp.ne.s32.totalorder %s148, %s151
      %p160 = scmp.eq.s32.totalorder %s31, 1
      %p161 = por %p159, %p160
      %p162 = scmp.ne.s32.totalorder %s151, %s152
      %p163 = scmp.eq.s32.totalorder %s31, 0
      %p164 = por %p162, %p163
      %p165 = scmp.ne.s32.totalorder %s151, %s152
      %p166 = scmp.eq.s32.totalorder %s32, 1
      %p167 = por %p165, %p166
      %p169 = scmp.ne.s32.totalorder %s152, %s168
      %p170 = scmp.eq.s32.totalorder %s32, 0
      %p171 = por %p169, %p170
      %s172 = ssub.s32 %s33, %s45
      %s173 = ssub.s32 %s34, %s41
      %s174 = sor.u32 %s172, %s173
      %p175 = scmp.eq.s32.totalorder %s174, 0
      %s177 = sadd.s32 %s176, 1
      %s178 = scalar_select %p175, %s176, %s177
      %p181 = pneg %p175
      %p182 = scmp.eq.s32.totalorder %s26, 1
      %p183 = por %p181, %p182
      %p184 = scmp.ne.s32.totalorder %s176, %s179
      %p185 = scmp.eq.s32.totalorder %s26, 0
      %p186 = por %p184, %p185
      %p187 = scmp.ne.s32.totalorder %s176, %s179
      %p188 = scmp.eq.s32.totalorder %s31, 1
      %p189 = por %p187, %p188
      %p190 = scmp.ne.s32.totalorder %s179, %s180
      %p191 = scmp.eq.s32.totalorder %s31, 0
      %p192 = por %p190, %p191
      %p193 = scmp.ne.s32.totalorder %s179, %s180
      %p194 = scmp.eq.s32.totalorder %s32, 1
      %p195 = por %p193, %p194
      %p197 = scmp.ne.s32.totalorder %s180, %s196
      %p198 = scmp.eq.s32.totalorder %s32, 0
      %p199 = por %p197, %p198
      %s200 = ssub.s32 %s33, %s45
      %s201 = ssub.s32 %s34, %s41
      %s202 = sor.u32 %s200, %s201
      %p203 = scmp.eq.s32.totalorder %s202, 0
      %s205 = sadd.s32 %s204, 1
      %s206 = scalar_select %p203, %s204, %s205
      %p209 = pneg %p203
      %p210 = scmp.eq.s32.totalorder %s26, 1
      %p211 = por %p209, %p210
      %p212 = scmp.ne.s32.totalorder %s204, %s207
      %p213 = scmp.eq.s32.totalorder %s26, 0
      %p214 = por %p212, %p213
      %p215 = scmp.ne.s32.totalorder %s204, %s207
      %p216 = scmp.eq.s32.totalorder %s31, 1
      %p217 = por %p215, %p216
      %p218 = scmp.ne.s32.totalorder %s207, %s208
      %p219 = scmp.eq.s32.totalorder %s31, 0
      %p220 = por %p218, %p219
      %p221 = scmp.ne.s32.totalorder %s207, %s208
      %p222 = scmp.eq.s32.totalorder %s32, 1
      %p223 = por %p221, %p222
      %p225 = scmp.ne.s32.totalorder %s208, %s224
      %p226 = scmp.eq.s32.totalorder %s32, 0
      %p227 = por %p225, %p226
      %p228 = scmp.le.s32.totalorder 1, %s26
      %p229 = scmp.lt.s32.totalorder %s26, 3
      %p230 = pnand %p228, %p229
      %p231 = pneg %p230
      // Predicated region
      $region9: #{tpu_custom_call.1} parent=5 // pred_check
        _
      $region10: #{tpu_custom_call.1} parent=5 // pred_check_branch
        %233 = sbr.rel (%p230) target = $region12
      $region11: #{tpu_custom_call.1} parent=5 // pred_region
        %s234 = ssub.s32 %s26, 1
        // Predicated region
        $region13: #{tpu_custom_call.1} parent=11 // pred_check
          %p235 = pneg %p59
        $region14: #{tpu_custom_call.1} parent=11 // pred_check_branch
          %237 = sbr.rel (%p235) target = $region16
        $region15: #{tpu_custom_call.1} parent=11 // pred_region
          %239 = vsyncadd [#allocation5], 0
          %s241 = sshll.u32 %s0, 4
          %s242 = int_to_ptr.hbm [resolvable:$true] %s241
          %244 = dma.hbm_to_smem %s242, 32, [#allocation2], [#allocation5]
        $region16: #{tpu_custom_call.1} parent=11 // pred_fallthru
          _
        // Predicated region
        $region17: #{tpu_custom_call.1} parent=11 // pred_check
          %p245 = pneg %p80
        $region18: #{tpu_custom_call.1} parent=11 // pred_check_branch
          %247 = sbr.rel (%p245) target = $region20
        $region19: #{tpu_custom_call.1} parent=11 // pred_region
          %249 = vsyncadd [#allocation7], 0
          %s251 = sshll.u32 %s1, 4
          %s252 = int_to_ptr.hbm [resolvable:$true] %s251
          %254 = dma.hbm_to_smem %s252, 32, [#allocation6], [#allocation7]
        $region20: #{tpu_custom_call.1} parent=11 // pred_fallthru
          _
      $region12: #{tpu_custom_call.1} parent=5 // pred_fallthru
        _
      %p255 = scmp.lt.s32.totalorder %s26, 2
      // Predicated region
      $region21: #{tpu_custom_call.1} parent=5 // pred_check
        %p256 = pneg %p255
      $region22: #{tpu_custom_call.1} parent=5 // pred_check_branch
        %258 = sbr.rel (%p256) target = $region24
      $region23: #{tpu_custom_call.1} parent=5 // pred_region
        // Predicated region
        $region25: #{tpu_custom_call.1} parent=23 // pred_check
          %p259 = pneg %p102
        $region26: #{tpu_custom_call.1} parent=23 // pred_check_branch
          %261 = sbr.rel (%p259) target = $region28
        $region27: #{tpu_custom_call.1} parent=23 // pred_region
          %s262 = sand.u32 %s92, 1
          %s263 = scalar_lea.sflag [#allocation3], %s262
          %s264 = sand.u32 %s92, 1
          %s265 = smul.addr %s264, 8
          %s266 = scalar_lea.vmem [#allocation8], %s265
          %268 = vsyncadd %s263, 0
          %s269 = smul.addr %s33, 4
          %s270 = sadd.s32 %s34, %s269
          %s271 = smul.addr %s270, 2
          %s272 = scalar_lea.hbm %s2, %s271
          %s273 = sshll.u32 %s272, 4
          %s274 = int_to_ptr.hbm [resolvable:$true] %s273
          %s275 = sshll.u32 %s266, 4
          %s276 = int_to_ptr.vmem [resolvable:$true] %s275
          %281 = dma.hbm_to_vmem [thread:$0]  %s274, 128, %s276, %s263, 32, 32, 2
        $region28: #{tpu_custom_call.1} parent=23 // pred_fallthru
          _
        // Predicated region
        $region29: #{tpu_custom_call.1} parent=23 // pred_check
          %p282 = pneg %p130
        $region30: #{tpu_custom_call.1} parent=23 // pred_check_branch
          %284 = sbr.rel (%p282) target = $region32
        $region31: #{tpu_custom_call.1} parent=23 // pred_region
          %s285 = sand.u32 %s26, 1
          %s286 = scalar_lea.sflag [#allocation10], %s285
          %s287 = sand.u32 %s120, 1
          %s288 = smul.addr %s287, 8
          %s289 = scalar_lea.vmem [#allocation9], %s288
          %291 = vsyncadd %s286, 0
          %s292 = smul.addr %s33, 4
          %s293 = sadd.s32 %s34, %s292
          %s294 = smul.addr %s293, 2
          %s295 = scalar_lea.hbm %s3, %s294
          %s296 = sshll.u32 %s295, 4
          %s297 = int_to_ptr.hbm [resolvable:$true] %s296
          %s298 = sshll.u32 %s289, 4
          %s299 = int_to_ptr.vmem [resolvable:$true] %s298
          %304 = dma.hbm_to_vmem [thread:$0]  %s297, 128, %s299, %s286, 32, 32, 2
        $region32: #{tpu_custom_call.1} parent=23 // pred_fallthru
          _
        // Predicated region
        $region33: #{tpu_custom_call.1} parent=23 // pred_check
          %p305 = pneg %p158
        $region34: #{tpu_custom_call.1} parent=23 // pred_check_branch
          %307 = sbr.rel (%p305) target = $region36
        $region35: #{tpu_custom_call.1} parent=23 // pred_region
          %s308 = sand.u32 %s26, 1
          %s309 = scalar_lea.sflag [#allocation10], %s308
          %s310 = sand.u32 %s148, 1
          %s311 = smul.addr %s310, 4
          %s312 = scalar_lea.vmem [#allocation11], %s311
          %314 = vsyncadd %s309, 0
          %s315 = smul.addr %s33, 2
          %s316 = sadd.s32 %s34, %s315
          %s317 = smul.addr %s316, 2
          %s318 = scalar_lea.hbm %s4, %s317
          %s319 = sshll.u32 %s318, 4
          %s320 = int_to_ptr.hbm [resolvable:$true] %s319
          %s321 = sshll.u32 %s312, 4
          %s322 = int_to_ptr.vmem [resolvable:$true] %s321
          %327 = dma.hbm_to_vmem [thread:$0]  %s320, 64, %s322, %s309, 32, 32, 2
        $region36: #{tpu_custom_call.1} parent=23 // pred_fallthru
          _
        // Predicated region
        $region37: #{tpu_custom_call.1} parent=23 // pred_check
          %p328 = pneg %p186
        $region38: #{tpu_custom_call.1} parent=23 // pred_check_branch
          %330 = sbr.rel (%p328) target = $region40
        $region39: #{tpu_custom_call.1} parent=23 // pred_region
          %s331 = sand.u32 %s176, 1
          %s332 = scalar_lea.sflag [#allocation13], %s331
          %s333 = sand.u32 %s176, 1
          %s334 = smul.addr %s333, 4
          %s335 = scalar_lea.vmem [#allocation12], %s334
          %337 = vsyncadd %s332, 0
          %s338 = smul.addr %s33, 2
          %s339 = sadd.s32 %s34, %s338
          %s340 = smul.addr %s339, 2
          %s341 = scalar_lea.hbm %s5, %s340
          %s342 = sshll.u32 %s341, 4
          %s343 = int_to_ptr.hbm [resolvable:$true] %s342
          %s344 = sshll.u32 %s335, 4
          %s345 = int_to_ptr.vmem [resolvable:$true] %s344
          %350 = dma.hbm_to_vmem [thread:$0]  %s343, 64, %s345, %s332, 32, 32, 2
        $region40: #{tpu_custom_call.1} parent=23 // pred_fallthru
          _
      $region24: #{tpu_custom_call.1} parent=5 // pred_fallthru
        _
      %p351 = scmp.le.s32.totalorder 1, %s26
      %p352 = scmp.lt.s32.totalorder %s26, 3
      %p353 = pnand %p351, %p352
      %p354 = pneg %p353
      // Predicated region
      $region41: #{tpu_custom_call.1} parent=5 // pred_check
        _
      $region42: #{tpu_custom_call.1} parent=5 // pred_check_branch
        %356 = sbr.rel (%p353) target = $region44
      $region43: #{tpu_custom_call.1} parent=5 // pred_region
        %s357 = ssub.s32 %s26, 1
        // Predicated region
        $region45: #{tpu_custom_call.1} parent=43 // pred_check
          %p358 = pneg %p59
        $region46: #{tpu_custom_call.1} parent=43 // pred_check_branch
          %360 = sbr.rel (%p358) target = $region48
        $region47: #{tpu_custom_call.1} parent=43 // pred_region
          %362 = dma.done [#allocation5], 32
        $region48: #{tpu_custom_call.1} parent=43 // pred_fallthru
          _
        // Predicated region
        $region49: #{tpu_custom_call.1} parent=43 // pred_check
          %p363 = pneg %p80
        $region50: #{tpu_custom_call.1} parent=43 // pred_check_branch
          %365 = sbr.rel (%p363) target = $region52
        $region51: #{tpu_custom_call.1} parent=43 // pred_region
          %367 = dma.done [#allocation7], 32
        $region52: #{tpu_custom_call.1} parent=43 // pred_fallthru
          _
        %s368 = sand.u32 %s95, 1
        %s369 = scalar_lea.sflag [#allocation3], %s368
        %s370 = sand.u32 %s95, 1
        %s371 = smul.addr %s370, 8
        %s372 = scalar_lea.vmem [#allocation8], %s371
        // Predicated region
        $region53: #{tpu_custom_call.1} parent=43 // pred_check
          %p373 = pneg %p108
        $region54: #{tpu_custom_call.1} parent=43 // pred_check_branch
          %375 = sbr.rel (%p373) target = $region56
        $region55: #{tpu_custom_call.1} parent=43 // pred_region
          %377 = dma.done %s369, 128
        $region56: #{tpu_custom_call.1} parent=43 // pred_fallthru
          _
        %s378 = sand.u32 %s31, 1
        %s379 = scalar_lea.sflag [#allocation10], %s378
        %s380 = sand.u32 %s123, 1
        %s381 = smul.addr %s380, 8
        %s382 = scalar_lea.vmem [#allocation9], %s381
        // Predicated region
        $region57: #{tpu_custom_call.1} parent=43 // pred_check
          %p383 = pneg %p136
        $region58: #{tpu_custom_call.1} parent=43 // pred_check_branch
          %385 = sbr.rel (%p383) target = $region60
        $region59: #{tpu_custom_call.1} parent=43 // pred_region
          %387 = dma.done %s379, 128
        $region60: #{tpu_custom_call.1} parent=43 // pred_fallthru
          _
        %s388 = sand.u32 %s31, 1
        %s389 = scalar_lea.sflag [#allocation10], %s388
        %s390 = sand.u32 %s151, 1
        %s391 = smul.addr %s390, 4
        %s392 = scalar_lea.vmem [#allocation11], %s391
        // Predicated region
        $region61: #{tpu_custom_call.1} parent=43 // pred_check
          %p393 = pneg %p164
        $region62: #{tpu_custom_call.1} parent=43 // pred_check_branch
          %395 = sbr.rel (%p393) target = $region64
        $region63: #{tpu_custom_call.1} parent=43 // pred_region
          %397 = dma.done %s389, 64
        $region64: #{tpu_custom_call.1} parent=43 // pred_fallthru
          _
        %s398 = sand.u32 %s179, 1
        %s399 = scalar_lea.sflag [#allocation13], %s398
        %s400 = sand.u32 %s179, 1
        %s401 = smul.addr %s400, 4
        %s402 = scalar_lea.vmem [#allocation12], %s401
        // Predicated region
        $region65: #{tpu_custom_call.1} parent=43 // pred_check
          %p403 = pneg %p192
        $region66: #{tpu_custom_call.1} parent=43 // pred_check_branch
          %405 = sbr.rel (%p403) target = $region68
        $region67: #{tpu_custom_call.1} parent=43 // pred_region
          %407 = dma.done %s399, 64
        $region68: #{tpu_custom_call.1} parent=43 // pred_fallthru
          _
        %408 = sfence
        %p409 = pneg %p59
        %p410 = pneg %p56
        %p411 = pneg %p80
        %p412 = pneg %p77
        %s413 = sand.u32 %s95, 1
        %s414 = scalar_lea.sflag [#allocation3], %s413
        %s415 = sand.u32 %s95, 1
        %s416 = smul.addr %s415, 8
        %s417 = scalar_lea.vmem [#allocation8], %s416
        %p418 = pneg %p108
        %p419 = pneg %p105
        %s420 = sand.u32 %s31, 1
        %s421 = scalar_lea.sflag [#allocation10], %s420
        %s422 = sand.u32 %s123, 1
        %s423 = smul.addr %s422, 8
        %s424 = scalar_lea.vmem [#allocation9], %s423
        %p425 = pneg %p136
        %p426 = pneg %p133
        %s427 = sand.u32 %s31, 1
        %s428 = scalar_lea.sflag [#allocation10], %s427
        %s429 = sand.u32 %s151, 1
        %s430 = smul.addr %s429, 4
        %s431 = scalar_lea.vmem [#allocation11], %s430
        %p432 = pneg %p164
        %p433 = pneg %p161
        %s434 = sand.u32 %s179, 1
        %s435 = scalar_lea.sflag [#allocation13], %s434
        %s436 = sand.u32 %s179, 1
        %s437 = smul.addr %s436, 4
        %s438 = scalar_lea.vmem [#allocation12], %s437
        %p439 = pneg %p192
        %p440 = pneg %p189
        %p441 = pneg %p220
        %p442 = pneg %p217
        %s443 = sand.u32 %s207, 1
        %s444 = scalar_lea.sflag [#allocation4], %s443
        %s445 = sand.u32 %s207, 1
        %s446 = smul.addr %s445, 8
        %s447 = scalar_lea.vmem [#allocation14], %s446
        %v448 = vld [vmem:[%s372] sm:$0x3]
        %s449 = smul.u32 %s35, 128
        %s450 = sld [smem:[#allocation2 + %s449]]
        %v451 = vstv %s450
        %v452 = vmul.f32 %v448, %v451
        %s453 = sadd.s32 %s449, 1
        %s454 = sld [smem:[#allocation2 + %s453]]
        %v455 = vstv %s454
        %v456 = vmul.f32 %v448, %v455
        %s457 = sadd.s32 %s449, 2
        %s458 = sld [smem:[#allocation2 + %s457]]
        %v459 = vstv %s458
        %v460 = vmul.f32 %v448, %v459
        %s461 = sadd.s32 %s449, 3
        %s462 = sld [smem:[#allocation2 + %s461]]
        %v463 = vstv %s462
        %v464 = vmul.f32 %v448, %v463
        %s465 = scalar_lea.vmem %s372, 2 [#allocation8]
        %v466 = vld [vmem:[%s465] sm:$0x3]
        %s467 = sadd.s32 %s449, 4
        %s468 = sld [smem:[#allocation2 + %s467]]
        %v469 = vstv %s468
        %v470 = vmul.f32 %v466, %v469
        %v471 = vadd.f32 %v452, %v470
        %s472 = sadd.s32 %s449, 5
        %s473 = sld [smem:[#allocation2 + %s472]]
        %v474 = vstv %s473
        %v475 = vmul.f32 %v466, %v474
        %v476 = vadd.f32 %v456, %v475
        %s477 = sadd.s32 %s449, 6
        %s478 = sld [smem:[#allocation2 + %s477]]
        %v479 = vstv %s478
        %v480 = vmul.f32 %v466, %v479
        %v481 = vadd.f32 %v460, %v480
        %s482 = sadd.s32 %s449, 7
        %s483 = sld [smem:[#allocation2 + %s482]]
        %v484 = vstv %s483
        %v485 = vmul.f32 %v466, %v484
        %v486 = vadd.f32 %v464, %v485
        %s487 = scalar_lea.vmem %s372, 4 [#allocation8]
        %v488 = vld [vmem:[%s487] sm:$0x3]
        %s489 = sadd.s32 %s449, 8
        %s490 = sld [smem:[#allocation2 + %s489]]
        %v491 = vstv %s490
        %v492 = vmul.f32 %v488, %v491
        %v493 = vadd.f32 %v471, %v492
        %s494 = sadd.s32 %s449, 9
        %s495 = sld [smem:[#allocation2 + %s494]]
        %v496 = vstv %s495
        %v497 = vmul.f32 %v488, %v496
        %v498 = vadd.f32 %v476, %v497
        %s499 = sadd.s32 %s449, 10
        %s500 = sld [smem:[#allocation2 + %s499]]
        %v501 = vstv %s500
        %v502 = vmul.f32 %v488, %v501
        %v503 = vadd.f32 %v481, %v502
        %s504 = sadd.s32 %s449, 11
        %s505 = sld [smem:[#allocation2 + %s504]]
        %v506 = vstv %s505
        %v507 = vmul.f32 %v488, %v506
        %v508 = vadd.f32 %v486, %v507
        %s509 = scalar_lea.vmem %s372, 6 [#allocation8]
        %v510 = vld [vmem:[%s509] sm:$0x3]
        %s511 = sadd.s32 %s449, 12
        %s512 = sld [smem:[#allocation2 + %s511]]
        %v513 = vstv %s512
        %v514 = vmul.f32 %v510, %v513
        %v515 = vadd.f32 %v493, %v514
        %s516 = sadd.s32 %s449, 13
        %s517 = sld [smem:[#allocation2 + %s516]]
        %v518 = vstv %s517
        %v519 = vmul.f32 %v510, %v518
        %v520 = vadd.f32 %v498, %v519
        %s521 = sadd.s32 %s449, 14
        %s522 = sld [smem:[#allocation2 + %s521]]
        %v523 = vstv %s522
        %v524 = vmul.f32 %v510, %v523
        %v525 = vadd.f32 %v503, %v524
        %s526 = sadd.s32 %s449, 15
        %s527 = sld [smem:[#allocation2 + %s526]]
        %v528 = vstv %s527
        %v529 = vmul.f32 %v510, %v528
        %v530 = vadd.f32 %v508, %v529
        %v531 = vld [vmem:[%s382] sm:$0x3]
        %s532 = sadd.s32 %s449, 16
        %s533 = sld [smem:[#allocation2 + %s532]]
        %v534 = vstv %s533
        %v535 = vmul.f32 %v531, %v534
        %v536 = vadd.f32 %v515, %v535
        %s537 = sadd.s32 %s449, 17
        %s538 = sld [smem:[#allocation2 + %s537]]
        %v539 = vstv %s538
        %v540 = vmul.f32 %v531, %v539
        %v541 = vadd.f32 %v520, %v540
        %s542 = sadd.s32 %s449, 18
        %s543 = sld [smem:[#allocation2 + %s542]]
        %v544 = vstv %s543
        %v545 = vmul.f32 %v531, %v544
        %v546 = vadd.f32 %v525, %v545
        %s547 = sadd.s32 %s449, 19
        %s548 = sld [smem:[#allocation2 + %s547]]
        %v549 = vstv %s548
        %v550 = vmul.f32 %v531, %v549
        %v551 = vadd.f32 %v530, %v550
        %s552 = scalar_lea.vmem %s382, 2 [#allocation9]
        %v553 = vld [vmem:[%s552] sm:$0x3]
        %s554 = sadd.s32 %s449, 20
        %s555 = sld [smem:[#allocation2 + %s554]]
        %v556 = vstv %s555
        %v557 = vmul.f32 %v553, %v556
        %v558 = vadd.f32 %v536, %v557
        %s559 = sadd.s32 %s449, 21
        %s560 = sld [smem:[#allocation2 + %s559]]
        %v561 = vstv %s560
        %v562 = vmul.f32 %v553, %v561
        %v563 = vadd.f32 %v541, %v562
        %s564 = sadd.s32 %s449, 22
        %s565 = sld [smem:[#allocation2 + %s564]]
        %v566 = vstv %s565
        %v567 = vmul.f32 %v553, %v566
        %v568 = vadd.f32 %v546, %v567
        %s569 = sadd.s32 %s449, 23
        %s570 = sld [smem:[#allocation2 + %s569]]
        %v571 = vstv %s570
        %v572 = vmul.f32 %v553, %v571
        %v573 = vadd.f32 %v551, %v572
        %s574 = scalar_lea.vmem %s382, 4 [#allocation9]
        %v575 = vld [vmem:[%s574] sm:$0x3]
        %s576 = sadd.s32 %s449, 24
        %s577 = sld [smem:[#allocation2 + %s576]]
        %v578 = vstv %s577
        %v579 = vmul.f32 %v575, %v578
        %v580 = vadd.f32 %v558, %v579
        %s581 = sadd.s32 %s449, 25
        %s582 = sld [smem:[#allocation2 + %s581]]
        %v583 = vstv %s582
        %v584 = vmul.f32 %v575, %v583
        %v585 = vadd.f32 %v563, %v584
        %s586 = sadd.s32 %s449, 26
        %s587 = sld [smem:[#allocation2 + %s586]]
        %v588 = vstv %s587
        %v589 = vmul.f32 %v575, %v588
        %v590 = vadd.f32 %v568, %v589
        %s591 = sadd.s32 %s449, 27
        %s592 = sld [smem:[#allocation2 + %s591]]
        %v593 = vstv %s592
        %v594 = vmul.f32 %v575, %v593
        %v595 = vadd.f32 %v573, %v594
        %s596 = scalar_lea.vmem %s382, 6 [#allocation9]
        %v597 = vld [vmem:[%s596] sm:$0x3]
        %s598 = sadd.s32 %s449, 28
        %s599 = sld [smem:[#allocation2 + %s598]]
        %v600 = vstv %s599
        %v601 = vmul.f32 %v597, %v600
        %v602 = vadd.f32 %v580, %v601
        %s603 = sadd.s32 %s449, 29
        %s604 = sld [smem:[#allocation2 + %s603]]
        %v605 = vstv %s604
        %v606 = vmul.f32 %v597, %v605
        %v607 = vadd.f32 %v585, %v606
        %s608 = sadd.s32 %s449, 30
        %s609 = sld [smem:[#allocation2 + %s608]]
        %v610 = vstv %s609
        %v611 = vmul.f32 %v597, %v610
        %v612 = vadd.f32 %v590, %v611
        %s613 = sadd.s32 %s449, 31
        %s614 = sld [smem:[#allocation2 + %s613]]
        %v615 = vstv %s614
        %v616 = vmul.f32 %v597, %v615
        %v617 = vadd.f32 %v595, %v616
        %v618 = vld [vmem:[%s392] sm:$0x3]
        %s619 = sadd.s32 %s449, 32
        %s620 = sld [smem:[#allocation2 + %s619]]
        %v621 = vstv %s620
        %v622 = vmul.f32 %v618, %v621
        %v623 = vadd.f32 %v602, %v622
        %s624 = sadd.s32 %s449, 33
        %s625 = sld [smem:[#allocation2 + %s624]]
        %v626 = vstv %s625
        %v627 = vmul.f32 %v618, %v626
        %v628 = vadd.f32 %v607, %v627
        %s629 = sadd.s32 %s449, 34
        %s630 = sld [smem:[#allocation2 + %s629]]
        %v631 = vstv %s630
        %v632 = vmul.f32 %v618, %v631
        %v633 = vadd.f32 %v612, %v632
        %s634 = sadd.s32 %s449, 35
        %s635 = sld [smem:[#allocation2 + %s634]]
        %v636 = vstv %s635
        %v637 = vmul.f32 %v618, %v636
        %v638 = vadd.f32 %v617, %v637
        %s639 = scalar_lea.vmem %s392, 2 [#allocation11]
        %v640 = vld [vmem:[%s639] sm:$0x3]
        %s641 = sadd.s32 %s449, 36
        %s642 = sld [smem:[#allocation2 + %s641]]
        %v643 = vstv %s642
        %v644 = vmul.f32 %v640, %v643
        %v645 = vadd.f32 %v623, %v644
        %s646 = sadd.s32 %s449, 37
        %s647 = sld [smem:[#allocation2 + %s646]]
        %v648 = vstv %s647
        %v649 = vmul.f32 %v640, %v648
        %v650 = vadd.f32 %v628, %v649
        %s651 = sadd.s32 %s449, 38
        %s652 = sld [smem:[#allocation2 + %s651]]
        %v653 = vstv %s652
        %v654 = vmul.f32 %v640, %v653
        %v655 = vadd.f32 %v633, %v654
        %s656 = sadd.s32 %s449, 39
        %s657 = sld [smem:[#allocation2 + %s656]]
        %v658 = vstv %s657
        %v659 = vmul.f32 %v640, %v658
        %v660 = vadd.f32 %v638, %v659
        %v661 = vld [vmem:[%s402] sm:$0x3]
        %s662 = sadd.s32 %s449, 40
        %s663 = sld [smem:[#allocation2 + %s662]]
        %v664 = vstv %s663
        %v665 = vmul.f32 %v661, %v664
        %v666 = vadd.f32 %v645, %v665
        %s667 = sadd.s32 %s449, 41
        %s668 = sld [smem:[#allocation2 + %s667]]
        %v669 = vstv %s668
        %v670 = vmul.f32 %v661, %v669
        %v671 = vadd.f32 %v650, %v670
        %s672 = sadd.s32 %s449, 42
        %s673 = sld [smem:[#allocation2 + %s672]]
        %v674 = vstv %s673
        %v675 = vmul.f32 %v661, %v674
        %v676 = vadd.f32 %v655, %v675
        %s677 = sadd.s32 %s449, 43
        %s678 = sld [smem:[#allocation2 + %s677]]
        %v679 = vstv %s678
        %v680 = vmul.f32 %v661, %v679
        %v681 = vadd.f32 %v660, %v680
        %s682 = scalar_lea.vmem %s402, 2 [#allocation12]
        %v683 = vld [vmem:[%s682] sm:$0x3]
        %s684 = sadd.s32 %s449, 44
        %s685 = sld [smem:[#allocation2 + %s684]]
        %v686 = vstv %s685
        %v687 = vmul.f32 %v683, %v686
        %v688 = vadd.f32 %v666, %v687
        %s689 = sadd.s32 %s449, 45
        %s690 = sld [smem:[#allocation2 + %s689]]
        %v691 = vstv %s690
        %v692 = vmul.f32 %v683, %v691
        %v693 = vadd.f32 %v671, %v692
        %s694 = sadd.s32 %s449, 46
        %s695 = sld [smem:[#allocation2 + %s694]]
        %v696 = vstv %s695
        %v697 = vmul.f32 %v683, %v696
        %v698 = vadd.f32 %v676, %v697
        %s699 = sadd.s32 %s449, 47
        %s700 = sld [smem:[#allocation2 + %s699]]
        %v701 = vstv %s700
        %v702 = vmul.f32 %v683, %v701
        %v703 = vadd.f32 %v681, %v702
        %s704 = sld [smem:[#allocation6 + %s449]]
        %v705 = vstv %s704
        %v706 = vadd.f32 %v688, %v705
        %707 = vst [vmem:[%s447] sm:$0x3] %v706
        %s708 = sld [smem:[#allocation6 + %s453]]
        %v709 = vstv %s708
        %v710 = vadd.f32 %v693, %v709
        %s711 = scalar_lea.vmem %s447, 2 [#allocation14]
        %712 = vst [vmem:[%s711] sm:$0x3] %v710
        %s713 = sld [smem:[#allocation6 + %s457]]
        %v714 = vstv %s713
        %v715 = vadd.f32 %v698, %v714
        %s716 = scalar_lea.vmem %s447, 4 [#allocation14]
        %717 = vst [vmem:[%s716] sm:$0x3] %v715
        %s718 = sld [smem:[#allocation6 + %s461]]
        %v719 = vstv %s718
        %v720 = vadd.f32 %v703, %v719
        %s721 = scalar_lea.vmem %s447, 6 [#allocation14]
        %722 = vst [vmem:[%s721] sm:$0x3] %v720
        %s723 = sand.u32 %s207, 1
        %s724 = scalar_lea.sflag [#allocation4], %s723
        %s725 = sand.u32 %s207, 1
        %s726 = smul.addr %s725, 8
        %s727 = scalar_lea.vmem [#allocation14], %s726
        // Predicated region
        $region69: #{tpu_custom_call.1} parent=43 // pred_check
          %p728 = pneg %p217
        $region70: #{tpu_custom_call.1} parent=43 // pred_check_branch
          %730 = sbr.rel (%p728) target = $region72
        $region71: #{tpu_custom_call.1} parent=43 // pred_region
          %732 = vsyncadd %s724, 0
          %s733 = smul.addr %s35, 4
          %s734 = sadd.s32 %s36, %s733
          %s735 = smul.addr %s734, 2
          %s736 = scalar_lea.hbm %s6, %s735
          %s737 = sshll.u32 %s727, 4
          %s738 = int_to_ptr.vmem [resolvable:$true] %s737
          %s739 = sshll.u32 %s736, 4
          %s740 = int_to_ptr.hbm [resolvable:$true] %s739
          %745 = dma.vmem_to_hbm [thread:$0]  %s738, 128, %s740, %s724, 32, 32, 2
        $region72: #{tpu_custom_call.1} parent=43 // pred_fallthru
          _
      $region44: #{tpu_custom_call.1} parent=5 // pred_fallthru
        _
      %p746 = scmp.le.s32.totalorder 2, %s26
      // Predicated region
      $region73: #{tpu_custom_call.1} parent=5 // pred_check
        %p747 = pneg %p746
      $region74: #{tpu_custom_call.1} parent=5 // pred_check_branch
        %749 = sbr.rel (%p747) target = $region76
      $region75: #{tpu_custom_call.1} parent=5 // pred_region
        %s750 = ssub.s32 %s26, 2
        // Predicated region
        $region77: #{tpu_custom_call.1} parent=75 // pred_check
          %p751 = pneg %p223
        $region78: #{tpu_custom_call.1} parent=75 // pred_check_branch
          %753 = sbr.rel (%p751) target = $region80
        $region79: #{tpu_custom_call.1} parent=75 // pred_region
          %s754 = sand.u32 %s208, 1
          %s755 = scalar_lea.sflag [#allocation4], %s754
          %s756 = sand.u32 %s208, 1
          %s757 = smul.addr %s756, 8
          %s758 = scalar_lea.vmem [#allocation14], %s757
          %760 = dma.done %s755, 128
        $region80: #{tpu_custom_call.1} parent=75 // pred_fallthru
          _
      $region76: #{tpu_custom_call.1} parent=5 // pred_fallthru
        _
    $region6: #{tpu_custom_call.1} parent=1 // loop_footer
      %s30 = sadd.s32 1, %s26
    $region7: #{tpu_custom_call.1} parent=1 // loop_footer_branch
      %25 = sbr.rel target = $region3
    $region8: #{tpu_custom_call.1} parent=1 // loop_exit
      _
    %761 = vsyncpa [#allocation3], 1
    %s762 = scalar_lea.sflag [#allocation3], 1
    %763 = vsyncpa %s762, 1
    %764 = vsyncpa [#allocation10], 1
    %s765 = scalar_lea.sflag [#allocation10], 1
    %766 = vsyncpa %s765, 1
    %767 = vsyncpa [#allocation13], 1
    %s768 = scalar_lea.sflag [#allocation13], 1
    %769 = vsyncpa %s768, 1
    %770 = vsyncpa [#allocation4], 1
    %s771 = scalar_lea.sflag [#allocation4], 1
    %772 = vsyncpa %s771, 1
    %773 = vsyncpa [#allocation5], 1
    %s774 = scalar_lea.sflag [#allocation5], 1
    %775 = vsyncpa %s774, 1
    %776 = vsyncpa [#allocation7], 1

</llo_original>
